<compile_context>
chip_gen: v6e
topology: v6e:2x2x1
jax: 0.10.0
libtpu: 0.0.40
codegen_flags: <defaults>
</compile_context>

<pallas_src>
import jax
import jax.numpy as jnp
import numpy as np
from jax.experimental import pallas as pl
from jax.experimental.pallas import tpu as pltpu


# ----------------------------- Pallas kernel 1 -------------------------------
# KNN-weighted feature reduction over the k gathered neighbours, single grid
# step on a lane-dense (k, N*T) layout (reduce over the sublane axis):
#   w[j,c]  = tw[n, idx[n,j]]   (scaled by 1/1000 where the gathered series is 0)
#   f1[c] = sum_j w ; f2[c] = sum_j(w*s)/f1 ; f3[c] = unbiased std_j(s)
def _feat_kernel(s_ref, w_ref, f1_ref, f2_ref, f3_ref):
    s = s_ref[...]                                     # (k, NT) f32
    w = w_ref[...]                                     # (k, NT) f32
    w = jnp.where(s == 0.0, w / 1000.0, w)
    f1 = jnp.sum(w, axis=0, keepdims=True)             # (1, NT)
    f2 = jnp.sum(w * s, axis=0, keepdims=True) * pl.reciprocal(f1, approx=True)
    mu = jnp.mean(s, axis=0, keepdims=True)
    var = jnp.sum((s - mu) ** 2, axis=0, keepdims=True) * (1.0 / (s.shape[0] - 1))
    f1_ref[...] = f1
    f2_ref[...] = f2
    f3_ref[...] = jnp.sqrt(var)


def knn_feature_reduce(sT, wT):
    # sT, wT: (k, N*T) f32  ->  three (1, N*T) f32 feature rows (lane-dense).
    k, NT = sT.shape
    full2 = lambda i: (0, 0)
    out_sds = jax.ShapeDtypeStruct((1, NT), jnp.float32)
    return pl.pallas_call(
        _feat_kernel,
        out_shape=(out_sds, out_sds, out_sds),
        grid=(1,),
        in_specs=[
            pl.BlockSpec((k, NT), full2),
            pl.BlockSpec((k, NT), full2),
        ],
        out_specs=(
            pl.BlockSpec((1, NT), full2),
            pl.BlockSpec((1, NT), full2),
            pl.BlockSpec((1, NT), full2),
        ),
        compiler_params=pltpu.CompilerParams(dimension_semantics=("arbitrary",)),
    )(sT, wT)


# ----------------------------- Pallas kernel 2 -------------------------------
# Fused transposed 3-layer MLP (clamp(min=0) == ReLU) + masked-MAE reduction.
# Single grid step: whole working set (< 1 MB) lives in VMEM, all three matmuls
# run on bf16 operands with f32 accumulation, mean/err/cnt written once.
# TODO(synk): at large N*T, tile the lane axis, mark it "parallel", and emit
# per-block err/cnt partials (reduced in the wrapper) to use both v7x cores;
# re-derive the tile ceiling against v7x's 64 MiB VMEM.
def _mlp_mae_kernel(x_ref, y_ref, m_ref,
                    w1_ref, b1_ref, w2_ref, b2_ref, w3_ref, b3_ref,
                    mean_ref, err_ref, cnt_ref):
    h = jnp.dot(w1_ref[...], x_ref[...], preferred_element_type=jnp.float32) + b1_ref[...]
    h = jnp.maximum(h, 0.0).astype(jnp.bfloat16)                    # (H, NT)
    h = jnp.dot(w2_ref[...], h, preferred_element_type=jnp.float32) + b2_ref[...]
    h = jnp.maximum(h, 0.0).astype(jnp.bfloat16)                    # (H, NT)
    mean = jnp.dot(w3_ref[...], h, preferred_element_type=jnp.float32) + b3_ref[...]
    mean_ref[...] = mean                                            # (1, NT) lane-dense

    sel = m_ref[...] > 0.0
    err_ref[...] = jnp.sum(jnp.where(sel, jnp.abs(y_ref[...] - mean), 0.0),
                           keepdims=True)                           # (1, 1)
    cnt_ref[...] = jnp.sum(jnp.where(sel, 1.0, 0.0), keepdims=True)


def mlp_masked_mae(xT, yT, mT, w1T, b1T, w2T, b2T, w3T, b3):
    Fp, NT = xT.shape
    H = w1T.shape[0]
    full2 = lambda i: (0, 0)
    return pl.pallas_call(
        _mlp_mae_kernel,
        out_shape=(jax.ShapeDtypeStruct((1, NT), jnp.float32),
                   jax.ShapeDtypeStruct((1, 1), jnp.float32),
                   jax.ShapeDtypeStruct((1, 1), jnp.float32)),
        grid=(1,),
        in_specs=[
            pl.BlockSpec((Fp, NT), full2),   # features (bf16)
            pl.BlockSpec((1, NT), full2),    # targets (f32)
            pl.BlockSpec((1, NT), full2),    # mask (f32)
            pl.BlockSpec((H, Fp), full2),    # w1^T (bf16)
            pl.BlockSpec((H, 1), full2),     # b1 (f32)
            pl.BlockSpec((H, H), full2),     # w2^T (bf16)
            pl.BlockSpec((H, 1), full2),     # b2 (f32)
            pl.BlockSpec((1, H), full2),     # w3^T (bf16)
            pl.BlockSpec((1, 1), full2),     # b3 (f32)
        ],
        out_specs=(
            pl.BlockSpec((1, NT), full2),
            pl.BlockSpec((1, 1), full2),
            pl.BlockSpec((1, 1), full2),
        ),
        compiler_params=pltpu.CompilerParams(dimension_semantics=("arbitrary",)),
    )(xT, yT, mT, w1T, b1T, w2T, b2T, w3T, b3)


# ------------------------------- model glue ----------------------------------
def our_model_forward(params, in_series, mask, residuals, k=20, tau=1.0):
    N, T = in_series.shape
    NT = N * T
    emb = params["embed0"]             # (N, E)    nn.Embedding(sizes[0], E).weight
    time_emb = params["time_embed"]    # (T, TE)   nn.Embedding(time_len, TE).weight
    E, TE = emb.shape[1], time_emb.shape[1]
    HID = params["w1"].shape[1]
    F = 3 + E + TE
    F_pad = ((F + 63) // 64) * 64

    # compute_feats: pairwise L2 distances between embedding rows (torch.cdist p=2)
    diff = emb[:, None, :] - emb[None, :, :]
    dist = jnp.sqrt(jnp.maximum(jnp.sum(diff * diff, axis=-1), 0.0)) + 0.001
    dist = dist * (1.0 - jnp.eye(N, dtype=dist.dtype))          # zero the diagonal
    tw = jnp.exp(-dist / tau)

    # TODO(synk): top-k neighbour selection + the data-dependent residuals gather
    # stay in plain JAX; at realistic N/T they could be fused into the Pallas path
    # via PrefetchScalarGridSpec (scalar-prefetched idx driving the index_map).
    idx = jnp.argsort(tw, axis=-1)[:, -(k + 1):-1]                        # (N, k)
    w_nk = jnp.take_along_axis(tw, idx, axis=1)                           # (N, k)
    s_ntk = jnp.take_along_axis(residuals, idx[:, None, :], axis=2)       # (N, T, k)

    # Lane-dense (k, N*T) layouts for the single-step feature kernel.
    sT = jnp.transpose(s_ntk, (2, 0, 1)).reshape(k, NT)                   # (k, NT)
    wT = jnp.broadcast_to(w_nk.T[:, :, None], (k, N, T)).reshape(k, NT)   # (k, NT)

    f1, f2, f3 = knn_feature_reduce(sT, wT)                               # (1, NT) x3

    # Transposed feature slab: rows = features [f1,f2,f3 | emb | time | zero pad].
    embT = jnp.broadcast_to(emb.T[:, :, None], (E, N, T)).reshape(E, NT)
    timeT = jnp.broadcast_to(time_emb.T[:, None, :], (TE, N, T)).reshape(TE, NT)
    xT = jnp.concatenate(
        [f1, f2, f3, embT, timeT, jnp.zeros((F_pad - F, NT), jnp.float32)],
        axis=0).astype(jnp.bfloat16)                                      # (F_pad, NT)
    # Dropout(p=0.2): identity (eval mode).

    # Transposed / zero-padded / bf16 weights; biases stay f32.
    w1T = jnp.concatenate(
        [params["w1"].T, jnp.zeros((HID, F_pad - F), jnp.float32)],
        axis=1).astype(jnp.bfloat16)                                      # (HID, F_pad)
    w2T = params["w2"].T.astype(jnp.bfloat16)                             # (HID, HID)
    w3T = params["w3"].T.astype(jnp.bfloat16)                             # (1, HID)
    b1T = params["b1"].T                                                  # (HID, 1)
    b2T = params["b2"].T                                                  # (HID, 1)
    b3 = params["b3"]                                                     # (1, 1)

    meanT, err, cnt = mlp_masked_mae(
        xT, in_series.reshape(1, NT), mask.reshape(1, NT),
        w1T, b1T, w2T, b2T, w3T, b3)
    mae = err[0, 0] / cnt[0, 0]
    return {"mae": mae}, meanT.reshape(N, T)


# --------------------------- pure-JAX reference -------------------------------
def reference_forward(params, in_series, mask, residuals, k=20, tau=1.0):
    N, T = in_series.shape
    emb, time_emb = params["embed0"], params["time_embed"]
    diff = emb[:, None, :] - emb[None, :, :]
    dist = jnp.sqrt(jnp.maximum(jnp.sum(diff * diff, -1), 0.0)) + 0.001
    dist = dist * (1.0 - jnp.eye(N, dtype=dist.dtype))
    tw = jnp.exp(-dist / tau)
    idx = jnp.argsort(tw, axis=-1)[:, -(k + 1):-1]
    w = jnp.take_along_axis(tw, idx, axis=1)[:, :, None]
    s = jnp.transpose(jnp.take_along_axis(residuals, idx[:, None, :], axis=2), (0, 2, 1))
    wb = jnp.broadcast_to(w, s.shape)
    wb = jnp.where(s == 0.0, wb / 1000.0, wb)
    f1 = wb.sum(1)
    f2 = (wb * s).sum(1) / wb.sum(1)
    f3 = jnp.std(s, axis=1, ddof=1)
    feats3 = jnp.stack([f1, f2, f3], axis=-1)                                    # (N, T, 3)
    hidden = jnp.concatenate([
        jnp.broadcast_to(emb[:, None, :], (N, T, emb.shape[1])),
        jnp.broadcast_to(time_emb[None, :, :], (N, T, time_emb.shape[1])),
    ], axis=-1)
    feats = jnp.concatenate([feats3, hidden], axis=-1)
    h = jnp.maximum(feats @ params["w1"] + params["b1"], 0.0)
    h = jnp.maximum(h @ params["w2"] + params["b2"], 0.0)
    mean = (h @ params["w3"] + params["b3"])[:, :, 0]
    sel = mask > 0
    mae = jnp.sum(jnp.where(sel, jnp.abs(in_series - mean), 0.0)) / jnp.sum(sel)
    return {"mae": mae}, mean


if __name__ == "__main__":
    # Small shapes implied by core(): sizes=[N], time_len=T, embedding_size=16,
    # time_embed=32, hidden_dim=256 (hard-coded), k=20, tau=1, nkernel=0.
    N, T, E, TE, HID, K, TAU = 32, 16, 16, 32, 256, 20, 1.0
    F = 3 + E + TE   # len(sizes) == 1

    key = jax.random.PRNGKey(0)
    ks = jax.random.split(key, 11)
    params = {
        "embed0":     jax.random.normal(ks[0], (N, E), jnp.float32),          # Embedding ~ N(0,1)
        "time_embed": jax.random.normal(ks[1], (T, TE), jnp.float32),
        "w1": jax.random.normal(ks[2], (F, HID), jnp.float32) / jnp.sqrt(F),
        "b1": jax.random.normal(ks[3], (1, HID), jnp.float32) * 0.01,
        "w2": jax.random.normal(ks[4], (HID, HID), jnp.float32) / jnp.sqrt(HID),
        "b2": jax.random.normal(ks[5], (1, HID), jnp.float32) * 0.01,
        "w3": jax.random.normal(ks[6], (HID, 1), jnp.float32) / jnp.sqrt(HID),
        "b3": jax.random.normal(ks[7], (1, 1), jnp.float32) * 0.01,
    }

    in_series = jax.random.normal(ks[8], (N, T), jnp.float32)
    mask = (jax.random.uniform(ks[9], (N, T)) > 0.3).astype(jnp.float32)
    # residuals as built in `train` (value repeated along the context axis), plus a
    # tiny deterministic perturbation so the std feature path is exercised.
    residuals = in_series[:, :, None] + 0.01 * jax.random.normal(ks[10], (N, T, N), jnp.float32)

    out, mean = our_model_forward(params, in_series, mask, residuals, k=K, tau=TAU)
    jax.block_until_ready(out["mae"])

    ref_out, ref_mean = reference_forward(params, in_series, mask, residuals, k=K, tau=TAU)
    # bf16 MXU operands (f32 accumulate) + approx reciprocal vs the pure-f32
    # reference => slightly widened tolerance.
    np.testing.assert_allclose(np.asarray(out["mae"]), np.asarray(ref_out["mae"]),
                               rtol=2e-2, atol=2e-2)
    np.testing.assert_allclose(np.asarray(mean), np.asarray(ref_mean),
                               rtol=2e-2, atol=2e-2)
    print("KERNEL_OK")
</pallas_src>

<mosaic_0001>
module attributes {stable_mosaic.version = 11 : i64} {
  func.func @_feat_kernel(%arg0: i32, %arg1: memref<20x512xf32, #tpu.memory_space<vmem>>, %arg2: memref<20x512xf32, #tpu.memory_space<vmem>>, %arg3: memref<1x512xf32, #tpu.memory_space<vmem>>, %arg4: memref<1x512xf32, #tpu.memory_space<vmem>>, %arg5: memref<1x512xf32, #tpu.memory_space<vmem>>) attributes {dimension_semantics = [#tpu.dimension_semantics<arbitrary>], iteration_bounds = array<i64: 1>, scalar_prefetch = 0 : i64, scratch_operands = 0 : i64, tpu.core_type = #tpu.core_type<tc>, window_params = [{pipeline_mode = #tpu.pipeline_mode<synchronous>, transform_indices = @transform_0, window_bounds = array<i64: 20, 512>}, {pipeline_mode = #tpu.pipeline_mode<synchronous>, transform_indices = @transform_1, window_bounds = array<i64: 20, 512>}, {pipeline_mode = #tpu.pipeline_mode<synchronous>, transform_indices = @transform_2, window_bounds = array<i64: 1, 512>}, {pipeline_mode = #tpu.pipeline_mode<synchronous>, transform_indices = @transform_3, window_bounds = array<i64: 1, 512>}, {pipeline_mode = #tpu.pipeline_mode<synchronous>, transform_indices = @transform_4, window_bounds = array<i64: 1, 512>}]} {
    %c0 = arith.constant 0 : index
    %c0_0 = arith.constant 0 : index
    %0 = vector.load %arg1[%c0, %c0_0] : memref<20x512xf32, #tpu.memory_space<vmem>>, vector<20x512xf32>
    %c0_1 = arith.constant 0 : index
    %c0_2 = arith.constant 0 : index
    %1 = vector.load %arg2[%c0_1, %c0_2] : memref<20x512xf32, #tpu.memory_space<vmem>>, vector<20x512xf32>
    %cst = arith.constant 0.000000e+00 : f32
    %2 = vector.broadcast %cst : f32 to vector<20x512xf32>
    %3 = arith.cmpf oeq, %0, %2 : vector<20x512xf32>
    %cst_3 = arith.constant 1.000000e+03 : f32
    %4 = vector.broadcast %cst_3 : f32 to vector<20x512xf32>
    %5 = arith.divf %1, %4 : vector<20x512xf32>
    %6 = arith.select %3, %5, %1 : vector<20x512xi1>, vector<20x512xf32>
    %cst_4 = arith.constant dense<0.000000e+00> : vector<512xf32>
    %7 = vector.multi_reduction <add>, %6, %cst_4 [0] : vector<20x512xf32> to vector<512xf32>
    %8 = vector.shape_cast %7 : vector<512xf32> to vector<1x512xf32>
    %9 = arith.mulf %6, %0 : vector<20x512xf32>
    %cst_5 = arith.constant dense<0.000000e+00> : vector<512xf32>
    %10 = vector.multi_reduction <add>, %9, %cst_5 [0] : vector<20x512xf32> to vector<512xf32>
    %11 = vector.shape_cast %10 : vector<512xf32> to vector<1x512xf32>
    %12 = tpu.reciprocal %8 {approx = true} : vector<1x512xf32> -> vector<1x512xf32>
    %13 = arith.mulf %11, %12 : vector<1x512xf32>
    %cst_6 = arith.constant dense<0.000000e+00> : vector<512xf32>
    %14 = vector.multi_reduction <add>, %0, %cst_6 [0] : vector<20x512xf32> to vector<512xf32>
    %15 = vector.shape_cast %14 : vector<512xf32> to vector<1x512xf32>
    %cst_7 = arith.constant 2.000000e+01 : f32
    %16 = vector.broadcast %cst_7 : f32 to vector<1x512xf32>
    %17 = arith.divf %15, %16 : vector<1x512xf32>
    %18 = vector.broadcast %17 : vector<1x512xf32> to vector<20x512xf32>
    %19 = arith.subf %0, %18 : vector<20x512xf32>
    %20 = arith.mulf %19, %19 : vector<20x512xf32>
    %cst_8 = arith.constant dense<0.000000e+00> : vector<512xf32>
    %21 = vector.multi_reduction <add>, %20, %cst_8 [0] : vector<20x512xf32> to vector<512xf32>
    %22 = vector.shape_cast %21 : vector<512xf32> to vector<1x512xf32>
    %cst_9 = arith.constant 0.0526315793 : f32
    %23 = vector.broadcast %cst_9 : f32 to vector<1x512xf32>
    %24 = arith.mulf %22, %23 : vector<1x512xf32>
    %c0_10 = arith.constant 0 : index
    %c0_11 = arith.constant 0 : index
    %25 = vector.load %arg3[%c0_10, %c0_11] : memref<1x512xf32, #tpu.memory_space<vmem>>, vector<1x512xf32>
    tpu.vector_store %arg3[%c0_10, %c0_11], %8 {strides = array<i32>} : memref<1x512xf32, #tpu.memory_space<vmem>>, vector<1x512xf32>,
    %c0_12 = arith.constant 0 : index
    %c0_13 = arith.constant 0 : index
    %26 = vector.load %arg4[%c0_12, %c0_13] : memref<1x512xf32, #tpu.memory_space<vmem>>, vector<1x512xf32>
    tpu.vector_store %arg4[%c0_12, %c0_13], %13 {strides = array<i32>} : memref<1x512xf32, #tpu.memory_space<vmem>>, vector<1x512xf32>,
    %27 = math.sqrt %24 : vector<1x512xf32>
    %c0_14 = arith.constant 0 : index
    %c0_15 = arith.constant 0 : index
    %28 = vector.load %arg5[%c0_14, %c0_15] : memref<1x512xf32, #tpu.memory_space<vmem>>, vector<1x512xf32>
    tpu.vector_store %arg5[%c0_14, %c0_15], %27 {strides = array<i32>} : memref<1x512xf32, #tpu.memory_space<vmem>>, vector<1x512xf32>,
    return
  }
  func.func @transform_0(%arg0: i32) -> (i32, i32) {
    %c0_i32 = arith.constant 0 : i32
    %c0_i32_0 = arith.constant 0 : i32
    %c0_i32_1 = arith.constant 0 : i32
    return %c0_i32, %c0_i32_0 : i32, i32
  }
  func.func @transform_1(%arg0: i32) -> (i32, i32) {
    %c0_i32 = arith.constant 0 : i32
    %c0_i32_0 = arith.constant 0 : i32
    %c0_i32_1 = arith.constant 0 : i32
    return %c0_i32, %c0_i32_0 : i32, i32
  }
  func.func @transform_2(%arg0: i32) -> (i32, i32) {
    %c0_i32 = arith.constant 0 : i32
    %c0_i32_0 = arith.constant 0 : i32
    %c0_i32_1 = arith.constant 0 : i32
    return %c0_i32, %c0_i32_0 : i32, i32
  }
  func.func @transform_3(%arg0: i32) -> (i32, i32) {
    %c0_i32 = arith.constant 0 : i32
    %c0_i32_0 = arith.constant 0 : i32
    %c0_i32_1 = arith.constant 0 : i32
    return %c0_i32, %c0_i32_0 : i32, i32
  }
  func.func @transform_4(%arg0: i32) -> (i32, i32) {
    %c0_i32 = arith.constant 0 : i32
    %c0_i32_0 = arith.constant 0 : i32
    %c0_i32_1 = arith.constant 0 : i32
    return %c0_i32, %c0_i32_0 : i32, i32
  }
}

</mosaic_0001>

<llo_original>
// kernel: tpu_custom_call.1
$region0: #{tpu_custom_call.1}
  #allocation0 [shape = 'u32[]', space=smem, size = 0x4, offset = 0x4, fixed_abs, tag = 'smem constant byte address 0x4 - core index']
  #allocation1 [shape = 'u32[144,128]{1,0:T(1,128)}', space=vmem, size = 0x12000, scoped, tag = 'internal scratch']
  %s0 = inlined_call_operand.hbm [shape: f32[20,512], index: 0, kind: input, shape index: {}]
  %s1 = inlined_call_operand.hbm [shape: f32[20,512], index: 1, kind: input, shape index: {}]
  %s2 = inlined_call_operand.hbm [shape: f32[1,512], index: 2, kind: output, shape index: {0}]
  %s3 = inlined_call_operand.hbm [shape: f32[1,512], index: 3, kind: output, shape index: {1}]
  %s4 = inlined_call_operand.hbm [shape: f32[1,512], index: 4, kind: output, shape index: {2}]
  %5 = xla_tuple %s2, %s3, %s4
  %s6 = sld [smem:[#allocation0]]
  $region42: #{tpu_custom_call.1} parent=0
    _
  %s8 = ssub.s32 1, %s6
  %s9 = scalar_select 0, %s8, %s6
  $region1: #{tpu_custom_call.1} parent=0
    #allocation2 [shape = 'u8[49152]{0}', space=vmem, size = 0xc000, scoped, tag = 'input window, operand 0, single buffered']
    #allocation3 [shape = 's32[1]{0}', space=sflag, size = 0x4, scoped, tag = 'scoped memory for tpu_custom_call.1']
    #allocation4 [shape = 's32[1]{0}', space=sflag, size = 0x4, scoped, tag = 'scoped memory for tpu_custom_call.1']
    #allocation5 [shape = 'u8[49152]{0}', space=vmem, size = 0xc000, scoped, tag = 'input window, operand 1, single buffered']
    #allocation6 [shape = 's32[1]{0}', space=sflag, size = 0x4, scoped, tag = 'scoped memory for tpu_custom_call.1']
    #allocation7 [shape = 'u8[2048]{0}', space=vmem, size = 0x800, scoped, tag = 'output window, operand 0, single buffered']
    #allocation8 [shape = 'u8[2048]{0}', space=vmem, size = 0x800, scoped, tag = 'output window, operand 1, single buffered']
    #allocation9 [shape = 's32[1]{0}', space=sflag, size = 0x4, scoped, tag = 'scoped memory for tpu_custom_call.1']
    #allocation10 [shape = 'u8[2048]{0}', space=vmem, size = 0x800, scoped, tag = 'output window, operand 2, single buffered']
    %10 = vsyncpa [#allocation3], 0
    %11 = vsyncpa [#allocation6], 0
    %12 = vsyncpa [#allocation4], 0
    %13 = vsyncpa [#allocation9], 0
    // Predicated region
    $region2: #{tpu_custom_call.1} parent=1 // pred_check
      _
    $region3: #{tpu_custom_call.1} parent=1 // pred_check_branch
      %15 = sbr.rel (0) target = $region5
    $region4: #{tpu_custom_call.1} parent=1 // pred_region
      %s17 = ssub.s32 1536, 1536
      %18 = vsyncadd [#allocation3], %s17
      %s19 = sshll.u32 [#allocation2], 4
      %s20 = int_to_ptr.vmem [resolvable:$true] %s19
      %25 = dma.hbm_to_vmem [thread:$0]  %s0, 1536, %s20, [#allocation3], 512, 512, 32
    $region5: #{tpu_custom_call.1} parent=1 // pred_fallthru
      _
    // Predicated region
    $region6: #{tpu_custom_call.1} parent=1 // pred_check
      _
    $region7: #{tpu_custom_call.1} parent=1 // pred_check_branch
      %27 = sbr.rel (0) target = $region9
    $region8: #{tpu_custom_call.1} parent=1 // pred_region
      %s29 = ssub.s32 1536, 1536
      %30 = vsyncadd [#allocation6], %s29
      %s31 = sshll.u32 [#allocation5], 4
      %s32 = int_to_ptr.vmem [resolvable:$true] %s31
      %37 = dma.hbm_to_vmem [thread:$0]  %s1, 1536, %s32, [#allocation6], 512, 512, 32
    $region9: #{tpu_custom_call.1} parent=1 // pred_fallthru
      _
    // Predicated region
    $region10: #{tpu_custom_call.1} parent=1 // pred_check
      _
    $region11: #{tpu_custom_call.1} parent=1 // pred_check_branch
      %39 = sbr.rel (0) target = $region13
    $region12: #{tpu_custom_call.1} parent=1 // pred_region
      %40 = dma.done [#allocation3], 1536
    $region13: #{tpu_custom_call.1} parent=1 // pred_fallthru
      _
    // Predicated region
    $region14: #{tpu_custom_call.1} parent=1 // pred_check
      _
    $region15: #{tpu_custom_call.1} parent=1 // pred_check_branch
      %42 = sbr.rel (0) target = $region17
    $region16: #{tpu_custom_call.1} parent=1 // pred_region
      %43 = dma.done [#allocation6], 1536
    $region17: #{tpu_custom_call.1} parent=1 // pred_fallthru
      _
    %v44 = vld [vmem:[#allocation2] sm:$0xff]
    %v45 = vld [vmem:[#allocation2 + $0x8] sm:$0xff]
    %v46 = vld [vmem:[#allocation2 + $0x10] sm:$0xff]
    %v47 = vld [vmem:[#allocation2 + $0x18] sm:$0xff]
    %v48 = vld [vmem:[#allocation2 + $0x20] sm:$0xff]
    %v49 = vld [vmem:[#allocation2 + $0x28] sm:$0xff]
    %v50 = vld [vmem:[#allocation2 + $0x30] sm:$0xff]
    %v51 = vld [vmem:[#allocation2 + $0x38] sm:$0xff]
    %v52 = vld [vmem:[#allocation2 + $0x40] sm:$0xf]
    %v53 = vld [vmem:[#allocation2 + $0x48] sm:$0xf]
    %v54 = vld [vmem:[#allocation2 + $0x50] sm:$0xf]
    %v55 = vld [vmem:[#allocation2 + $0x58] sm:$0xf]
    %v56 = vld [vmem:[#allocation5] sm:$0xff]
    %v57 = vld [vmem:[#allocation5 + $0x8] sm:$0xff]
    %v58 = vld [vmem:[#allocation5 + $0x10] sm:$0xff]
    %v59 = vld [vmem:[#allocation5 + $0x18] sm:$0xff]
    %v60 = vld [vmem:[#allocation5 + $0x20] sm:$0xff]
    %v61 = vld [vmem:[#allocation5 + $0x28] sm:$0xff]
    %v62 = vld [vmem:[#allocation5 + $0x30] sm:$0xff]
    %v63 = vld [vmem:[#allocation5 + $0x38] sm:$0xff]
    %v64 = vld [vmem:[#allocation5 + $0x40] sm:$0xf]
    %v65 = vld [vmem:[#allocation5 + $0x48] sm:$0xf]
    %v66 = vld [vmem:[#allocation5 + $0x50] sm:$0xf]
    %v67 = vld [vmem:[#allocation5 + $0x58] sm:$0xf]
    %vm68 = vcmp.eq.f32.partialorder %v44, 0.0
    %vm69 = vcmp.eq.f32.partialorder %v45, 0.0
    %vm70 = vcmp.eq.f32.partialorder %v46, 0.0
    %vm71 = vcmp.eq.f32.partialorder %v47, 0.0
    %vm72 = vcmp.eq.f32.partialorder %v48, 0.0
    %vm73 = vcmp.eq.f32.partialorder %v49, 0.0
    %vm74 = vcmp.eq.f32.partialorder %v50, 0.0
    %vm75 = vcmp.eq.f32.partialorder %v51, 0.0
    %vm76 = vcmp.eq.f32.partialorder %v52, 0.0
    %vm77 = vcmp.eq.f32.partialorder %v53, 0.0
    %vm78 = vcmp.eq.f32.partialorder %v54, 0.0
    %vm79 = vcmp.eq.f32.partialorder %v55, 0.0
    %v80 = vrcp.pop 1000.0
    %v81 = vmul.f32 %v56, %v80
    %v82 = vmul.f32 %v57, %v80
    %v83 = vmul.f32 %v58, %v80
    %v84 = vmul.f32 %v59, %v80
    %v85 = vmul.f32 %v60, %v80
    %v86 = vmul.f32 %v61, %v80
    %v87 = vmul.f32 %v62, %v80
    %v88 = vmul.f32 %v63, %v80
    %v89 = vmul.f32 %v64, %v80
    %v90 = vmul.f32 %v65, %v80
    %v91 = vmul.f32 %v66, %v80
    %v92 = vmul.f32 %v67, %v80
    %v93 = vsel %vm68, %v81, %v56
    %v94 = vsel %vm69, %v82, %v57
    %v95 = vsel %vm70, %v83, %v58
    %v96 = vsel %vm71, %v84, %v59
    %v97 = vsel %vm72, %v85, %v60
    %v98 = vsel %vm73, %v86, %v61
    %v99 = vsel %vm74, %v87, %v62
    %v100 = vsel %vm75, %v88, %v63
    %v101 = vsel %vm76, %v89, %v64
    %v102 = vsel %vm77, %v90, %v65
    %v103 = vsel %vm78, %v91, %v66
    %v104 = vsel %vm79, %v92, %v67
    %v105 = vadd.f32 %v93, %v97
    %vm106 = vcmask 1043456
    %v107 = vsel %vm106, %v101, 0.0
    %v108 = vadd.f32 %v105, %v107
    %v109 = vrot.slane %v108, 4
    %v110 = vadd.f32 %v108, %v109
    %v111 = vrot.slane %v110, 2
    %v112 = vadd.f32 %v110, %v111
    %v113 = vrot.slane %v112, 1
    %v114 = vadd.f32 %v112, %v113
    %v115 = vadd.f32 %v94, %v98
    %v116 = vsel %vm106, %v102, 0.0
    %v117 = vadd.f32 %v115, %v116
    %v118 = vrot.slane %v117, 4
    %v119 = vadd.f32 %v117, %v118
    %v120 = vrot.slane %v119, 2
    %v121 = vadd.f32 %v119, %v120
    %v122 = vrot.slane %v121, 1
    %v123 = vadd.f32 %v121, %v122
    %v124 = vadd.f32 %v95, %v99
    %v125 = vsel %vm106, %v103, 0.0
    %v126 = vadd.f32 %v124, %v125
    %v127 = vrot.slane %v126, 4
    %v128 = vadd.f32 %v126, %v127
    %v129 = vrot.slane %v128, 2
    %v130 = vadd.f32 %v128, %v129
    %v131 = vrot.slane %v130, 1
    %v132 = vadd.f32 %v130, %v131
    %v133 = vadd.f32 %v96, %v100
    %v134 = vsel %vm106, %v104, 0.0
    %v135 = vadd.f32 %v133, %v134
    %v136 = vrot.slane %v135, 4
    %v137 = vadd.f32 %v135, %v136
    %v138 = vrot.slane %v137, 2
    %v139 = vadd.f32 %v137, %v138
    %v140 = vrot.slane %v139, 1
    %v141 = vadd.f32 %v139, %v140
    %v142 = vmul.f32 %v93, %v44
    %v143 = vmul.f32 %v94, %v45
    %v144 = vmul.f32 %v95, %v46
    %v145 = vmul.f32 %v96, %v47
    %v146 = vmul.f32 %v97, %v48
    %v147 = vmul.f32 %v98, %v49
    %v148 = vmul.f32 %v99, %v50
    %v149 = vmul.f32 %v100, %v51
    %v150 = vmul.f32 %v101, %v52
    %v151 = vmul.f32 %v102, %v53
    %v152 = vmul.f32 %v103, %v54
    %v153 = vmul.f32 %v104, %v55
    %v154 = vadd.f32 %v142, %v146
    %v155 = vsel %vm106, %v150, 0.0
    %v156 = vadd.f32 %v154, %v155
    %v157 = vrot.slane %v156, 4
    %v158 = vadd.f32 %v156, %v157
    %v159 = vrot.slane %v158, 2
    %v160 = vadd.f32 %v158, %v159
    %v161 = vrot.slane %v160, 1
    %v162 = vadd.f32 %v160, %v161
    %v163 = vadd.f32 %v143, %v147
    %v164 = vsel %vm106, %v151, 0.0
    %v165 = vadd.f32 %v163, %v164
    %v166 = vrot.slane %v165, 4
    %v167 = vadd.f32 %v165, %v166
    %v168 = vrot.slane %v167, 2
    %v169 = vadd.f32 %v167, %v168
    %v170 = vrot.slane %v169, 1
    %v171 = vadd.f32 %v169, %v170
    %v172 = vadd.f32 %v144, %v148
    %v173 = vsel %vm106, %v152, 0.0
    %v174 = vadd.f32 %v172, %v173
    %v175 = vrot.slane %v174, 4
    %v176 = vadd.f32 %v174, %v175
    %v177 = vrot.slane %v176, 2
    %v178 = vadd.f32 %v176, %v177
    %v179 = vrot.slane %v178, 1
    %v180 = vadd.f32 %v178, %v179
    %v181 = vadd.f32 %v145, %v149
    %v182 = vsel %vm106, %v153, 0.0
    %v183 = vadd.f32 %v181, %v182
    %v184 = vrot.slane %v183, 4
    %v185 = vadd.f32 %v183, %v184
    %v186 = vrot.slane %v185, 2
    %v187 = vadd.f32 %v185, %v186
    %v188 = vrot.slane %v187, 1
    %v189 = vadd.f32 %v187, %v188
    %v190 = vrcp.pop %v114
    %v191 = vrcp.pop %v123
    %v192 = vrcp.pop %v132
    %v193 = vrcp.pop %v141
    %v194 = vmul.f32 %v162, %v190
    %v195 = vmul.f32 %v171, %v191
    %v196 = vmul.f32 %v180, %v192
    %v197 = vmul.f32 %v189, %v193
    %v198 = vadd.f32 %v44, %v48
    %v199 = vsel %vm106, %v52, 0.0
    %v200 = vadd.f32 %v198, %v199
    %v201 = vrot.slane %v200, 4
    %v202 = vadd.f32 %v200, %v201
    %v203 = vrot.slane %v202, 2
    %v204 = vadd.f32 %v202, %v203
    %v205 = vrot.slane %v204, 1
    %v206 = vadd.f32 %v204, %v205
    %v207 = vadd.f32 %v45, %v49
    %v208 = vsel %vm106, %v53, 0.0
    %v209 = vadd.f32 %v207, %v208
    %v210 = vrot.slane %v209, 4
    %v211 = vadd.f32 %v209, %v210
    %v212 = vrot.slane %v211, 2
    %v213 = vadd.f32 %v211, %v212
    %v214 = vrot.slane %v213, 1
    %v215 = vadd.f32 %v213, %v214
    %v216 = vadd.f32 %v46, %v50
    %v217 = vsel %vm106, %v54, 0.0
    %v218 = vadd.f32 %v216, %v217
    %v219 = vrot.slane %v218, 4
    %v220 = vadd.f32 %v218, %v219
    %v221 = vrot.slane %v220, 2
    %v222 = vadd.f32 %v220, %v221
    %v223 = vrot.slane %v222, 1
    %v224 = vadd.f32 %v222, %v223
    %v225 = vadd.f32 %v47, %v51
    %v226 = vsel %vm106, %v55, 0.0
    %v227 = vadd.f32 %v225, %v226
    %v228 = vrot.slane %v227, 4
    %v229 = vadd.f32 %v227, %v228
    %v230 = vrot.slane %v229, 2
    %v231 = vadd.f32 %v229, %v230
    %v232 = vrot.slane %v231, 1
    %v233 = vadd.f32 %v231, %v232
    %v234 = vrcp.pop 20.0
    %v235 = vmul.f32 %v206, %v234
    %v236 = vmul.f32 %v215, %v234
    %v237 = vmul.f32 %v224, %v234
    %v238 = vmul.f32 %v233, %v234
    %v239 = vsub.f32 %v44, %v235
    %v240 = vsub.f32 %v45, %v236
    %v241 = vsub.f32 %v46, %v237
    %v242 = vsub.f32 %v47, %v238
    %v243 = vsub.f32 %v48, %v235
    %v244 = vsub.f32 %v49, %v236
    %v245 = vsub.f32 %v50, %v237
    %v246 = vsub.f32 %v51, %v238
    %v247 = vsub.f32 %v52, %v235
    %v248 = vsub.f32 %v53, %v236
    %v249 = vsub.f32 %v54, %v237
    %v250 = vsub.f32 %v55, %v238
    %v251 = vmul.f32 %v239, %v239
    %v252 = vmul.f32 %v240, %v240
    %v253 = vmul.f32 %v241, %v241
    %v254 = vmul.f32 %v242, %v242
    %v255 = vmul.f32 %v243, %v243
    %v256 = vmul.f32 %v244, %v244
    %v257 = vmul.f32 %v245, %v245
    %v258 = vmul.f32 %v246, %v246
    %v259 = vmul.f32 %v247, %v247
    %v260 = vmul.f32 %v248, %v248
    %v261 = vmul.f32 %v249, %v249
    %v262 = vmul.f32 %v250, %v250
    %v263 = vadd.f32 %v251, %v255
    %v264 = vsel %vm106, %v259, 0.0
    %v265 = vadd.f32 %v263, %v264
    %v266 = vrot.slane %v265, 4
    %v267 = vadd.f32 %v265, %v266
    %v268 = vrot.slane %v267, 2
    %v269 = vadd.f32 %v267, %v268
    %v270 = vrot.slane %v269, 1
    %v271 = vadd.f32 %v269, %v270
    %v272 = vadd.f32 %v252, %v256
    %v273 = vsel %vm106, %v260, 0.0
    %v274 = vadd.f32 %v272, %v273
    %v275 = vrot.slane %v274, 4
    %v276 = vadd.f32 %v274, %v275
    %v277 = vrot.slane %v276, 2
    %v278 = vadd.f32 %v276, %v277
    %v279 = vrot.slane %v278, 1
    %v280 = vadd.f32 %v278, %v279
    %v281 = vadd.f32 %v253, %v257
    %v282 = vsel %vm106, %v261, 0.0
    %v283 = vadd.f32 %v281, %v282
    %v284 = vrot.slane %v283, 4
    %v285 = vadd.f32 %v283, %v284
    %v286 = vrot.slane %v285, 2
    %v287 = vadd.f32 %v285, %v286
    %v288 = vrot.slane %v287, 1
    %v289 = vadd.f32 %v287, %v288
    %v290 = vadd.f32 %v254, %v258
    %v291 = vsel %vm106, %v262, 0.0
    %v292 = vadd.f32 %v290, %v291
    %v293 = vrot.slane %v292, 4
    %v294 = vadd.f32 %v292, %v293
    %v295 = vrot.slane %v294, 2
    %v296 = vadd.f32 %v294, %v295
    %v297 = vrot.slane %v296, 1
    %v298 = vadd.f32 %v296, %v297
    %v299 = vmul.f32 %v271, 0.05263158
    %v300 = vmul.f32 %v280, 0.05263158
    %v301 = vmul.f32 %v289, 0.05263158
    %v302 = vmul.f32 %v298, 0.05263158
    %v307 = vcombine.low %v114, %v123
    %v308 = vcombine.low %v132, %v141
    %v310 = vunpack.c.l.s4 1966171168
    %v311 = vunpack.c.0.s8 %v310
    %v312 = vlaneseq
    %v313 = vshrl.u32 %v312, 7
    %v314 = vsub.s32 %v311, %v313
    %v315 = vrot.slane %v307, %v314
    %v317 = vunpack.c.l.s4 1966171168
    %v318 = vunpack.c.0.s8 %v317
    %v319 = vlaneseq
    %v320 = vshrl.u32 %v319, 7
    %v321 = vsub.s32 %v318, %v320
    %v322 = vrot.slane %v308, %v321
    %v323 = vcombine.low %v315, %v322
    %v325 = vunpack.c.l.s4 1966171168
    %v326 = vunpack.c.0.s8 %v325
    %v327 = vlaneseq
    %v328 = vshrl.u32 %v327, 7
    %v329 = vsub.s32 %v326, %v328
    %v330 = vrot.slane %v323, %v329
    %v332 = vlaneseq
    %vm333 = vcmp.ge.s32.totalorder %v332, 0
    %vm334 = vcmp.lt.s32.totalorder %v332, 512
    %vm335 = vmand %vm333, %vm334
    %336 = vst.msk [vmem:[#allocation7] sm:$0xf] %vm335, %v330
    %v341 = vcombine.low %v194, %v195
    %v342 = vcombine.low %v196, %v197
    %v344 = vunpack.c.l.s4 1966171168
    %v345 = vunpack.c.0.s8 %v344
    %v346 = vlaneseq
    %v347 = vshrl.u32 %v346, 7
    %v348 = vsub.s32 %v345, %v347
    %v349 = vrot.slane %v341, %v348
    %v351 = vunpack.c.l.s4 1966171168
    %v352 = vunpack.c.0.s8 %v351
    %v353 = vlaneseq
    %v354 = vshrl.u32 %v353, 7
    %v355 = vsub.s32 %v352, %v354
    %v356 = vrot.slane %v342, %v355
    %v357 = vcombine.low %v349, %v356
    %v359 = vunpack.c.l.s4 1966171168
    %v360 = vunpack.c.0.s8 %v359
    %v361 = vlaneseq
    %v362 = vshrl.u32 %v361, 7
    %v363 = vsub.s32 %v360, %v362
    %v364 = vrot.slane %v357, %v363
    %366 = vst.msk [vmem:[#allocation8] sm:$0xf] %vm335, %v364
    %v367 = vrsqrt.pop %v299
    %v368 = vmul.f32 %v299, %v367
    %vm369 = vcmp.eq.f32.partialorder %v299, inf
    %v370 = vsel %vm369, %v299, %v368
    %vm371 = vcmp.eq.f32.partialorder %v299, 0.0
    %v372 = vand.u32 %v299, 2147483648
    %v373 = vsel %vm371, %v372, %v370
    %v374 = vrsqrt.pop %v300
    %v375 = vmul.f32 %v300, %v374
    %vm376 = vcmp.eq.f32.partialorder %v300, inf
    %v377 = vsel %vm376, %v300, %v375
    %vm378 = vcmp.eq.f32.partialorder %v300, 0.0
    %v379 = vand.u32 %v300, 2147483648
    %v380 = vsel %vm378, %v379, %v377
    %v381 = vrsqrt.pop %v301
    %v382 = vmul.f32 %v301, %v381
    %vm383 = vcmp.eq.f32.partialorder %v301, inf
    %v384 = vsel %vm383, %v301, %v382
    %vm385 = vcmp.eq.f32.partialorder %v301, 0.0
    %v386 = vand.u32 %v301, 2147483648
    %v387 = vsel %vm385, %v386, %v384
    %v388 = vrsqrt.pop %v302
    %v389 = vmul.f32 %v302, %v388
    %vm390 = vcmp.eq.f32.partialorder %v302, inf
    %v391 = vsel %vm390, %v302, %v389
    %vm392 = vcmp.eq.f32.partialorder %v302, 0.0
    %v393 = vand.u32 %v302, 2147483648
    %v394 = vsel %vm392, %v393, %v391
    %v399 = vcombine.low %v373, %v380
    %v400 = vcombine.low %v387, %v394
    %v402 = vunpack.c.l.s4 1966171168
    %v403 = vunpack.c.0.s8 %v402
    %v404 = vlaneseq
    %v405 = vshrl.u32 %v404, 7
    %v406 = vsub.s32 %v403, %v405
    %v407 = vrot.slane %v399, %v406
    %v409 = vunpack.c.l.s4 1966171168
    %v410 = vunpack.c.0.s8 %v409
    %v411 = vlaneseq
    %v412 = vshrl.u32 %v411, 7
    %v413 = vsub.s32 %v410, %v412
    %v414 = vrot.slane %v400, %v413
    %v415 = vcombine.low %v407, %v414
    %v417 = vunpack.c.l.s4 1966171168
    %v418 = vunpack.c.0.s8 %v417
    %v419 = vlaneseq
    %v420 = vshrl.u32 %v419, 7
    %v421 = vsub.s32 %v418, %v420
    %v422 = vrot.slane %v415, %v421
    %424 = vst.msk [vmem:[#allocation10] sm:$0xf] %vm335, %v422
    // Predicated region
    $region18: #{tpu_custom_call.1} parent=1 // pred_check
      _
    $region19: #{tpu_custom_call.1} parent=1 // pred_check_branch
      %426 = sbr.rel (0) target = $region21
    $region20: #{tpu_custom_call.1} parent=1 // pred_region
      %s428 = ssub.s32 64, 64
      %429 = vsyncadd [#allocation4], %s428
      %s431 = sshll.u32 [#allocation7], 4
      %s432 = int_to_ptr.vmem [resolvable:$true] %s431
      %434 = dma.vmem_to_hbm [thread:$0]  %s432, 64, %s2, [#allocation4]
    $region21: #{tpu_custom_call.1} parent=1 // pred_fallthru
      _
    // Predicated region
    $region22: #{tpu_custom_call.1} parent=1 // pred_check
      _
    $region23: #{tpu_custom_call.1} parent=1 // pred_check_branch
      %436 = sbr.rel (0) target = $region25
    $region24: #{tpu_custom_call.1} parent=1 // pred_region
      %s438 = ssub.s32 64, 64
      %439 = vsyncadd [#allocation9], %s438
      %s441 = sshll.u32 [#allocation8], 4
      %s442 = int_to_ptr.vmem [resolvable:$true] %s441
      %444 = dma.vmem_to_hbm [thread:$0]  %s442, 64, %s3, [#allocation9]
    $region25: #{tpu_custom_call.1} parent=1 // pred_fallthru
      _
    // Predicated region
    $region26: #{tpu_custom_call.1} parent=1 // pred_check
      _
    $region27: #{tpu_custom_call.1} parent=1 // pred_check_branch
      %446 = sbr.rel (0) target = $region29
    $region28: #{tpu_custom_call.1} parent=1 // pred_region
      %s448 = ssub.s32 64, 64
      %449 = vsyncadd [#allocation9], %s448
      %s451 = sshll.u32 [#allocation10], 4
      %s452 = int_to_ptr.vmem [resolvable:$true] %s451
      %454 = dma.vmem_to_hbm [thread:$0]  %s452, 64, %s4, [#allocation9]
    $region29: #{tpu_custom_call.1} parent=1 // pred_fallthru
      _
    // Predicated region
    $region30: #{tpu_custom_call.1} parent=1 // pred_check
      _
    $region31: #{tpu_custom_call.1} parent=1 // pred_check_branch
      %456 = sbr.rel (0) target = $region33
    $region32: #{tpu_custom_call.1} parent=1 // pred_region
      %457 = dma.done [#allocation4], 64
    $region33: #{tpu_custom_call.1} parent=1 // pred_fallthru
      _
    // Predicated region
    $region34: #{tpu_custom_call.1} parent=1 // pred_check
      _
    $region35: #{tpu_custom_call.1} parent=1 // pred_check_branch
      %459 = sbr.rel (0) target = $region37
    $region36: #{tpu_custom_call.1} parent=1 // pred_region
      %460 = dma.done [#allocation9], 64
    $region37: #{tpu_custom_call.1} parent=1 // pred_fallthru
      _
    // Predicated region
    $region38: #{tpu_custom_call.1} parent=1 // pred_check
      _
    $region39: #{tpu_custom_call.1} parent=1 // pred_check_branch
      %462 = sbr.rel (0) target = $region41
    $region40: #{tpu_custom_call.1} parent=1 // pred_region
      %463 = dma.done [#allocation9], 64
    $region41: #{tpu_custom_call.1} parent=1 // pred_fallthru
      _
    %464 = vsyncpa [#allocation3], 1
    %465 = vsyncpa [#allocation6], 1
    %466 = vsyncpa [#allocation4], 1
    %467 = vsyncpa [#allocation9], 1

</llo_original>
